<compile_context>
chip_gen: v5e
topology: v5e:2x2
jax: 0.10.0
libtpu: 0.0.40
codegen_flags: <defaults>
</compile_context>

<pallas_src>
import jax
import jax.numpy as jnp
from jax.experimental import pallas as pl
from jax.experimental.pallas import tpu as pltpu


def _round_up(n, m):
    return ((n + m - 1) // m) * m


def _choose_tile(B, tb_req):
    """Pick a sublane-aligned batch tile and the padded batch size."""
    B8 = _round_up(B, 8)
    # Clamp to the (8-rounded) batch so tiny batches aren't over-padded, and
    # force the tile itself to a multiple of 8 (sublane tiling rule).
    tb = _round_up(min(max(tb_req, 8), B8), 8)
    # v7x has 2 TensorCores per chip: keep >= 2 tiles on the "parallel" batch
    # axis when the batch allows it, so work isn't serialized onto one core.
    # No effect on v5e/v6e (single TC).
    if B8 // tb < 2 and B8 >= 16:
        tb = _round_up((B8 + 1) // 2, 8)
    B_pad = _round_up(B8, tb)
    return tb, B_pad


def _mlp_kernel(x_ref, w1_ref, b1_ref, w2_ref, b2_ref, o_ref):
    # Layer 1 on the MXU: (tb, D_in) @ (D_in, H_pad) with f32 accumulate.
    h = jnp.dot(x_ref[...], w1_ref[...], preferred_element_type=jnp.float32)
    h = jnp.maximum(h + b1_ref[...], 0.0)            # bias + ReLU on the VPU

    # Layer 2 (H -> 1): VPU multiply + XLU lane reduction (N=1 MXU matmul
    # would waste almost the whole output tile).
    z = jnp.sum(h * w2_ref[...], axis=-1, keepdims=True)     # (tb, 1) f32
    y = jax.nn.sigmoid(z + b2_ref[0, 0])                      # b2 scalar from SMEM

    # Pack lane-dense: (tb, 1) -> (1, 1, tb).  This is a tb/8-vreg XLU
    # relayout in-kernel; the writeback is 4 B/row instead of a 128-lane
    # broadcast (512 B/row), which dominated HBM traffic before.
    o_ref[...] = y.reshape(o_ref.shape).astype(o_ref.dtype)


def prepare_neural_net1_params(w1, b1, w2, b2, *, input_dtype=jnp.float32):
    """One-time parameter prep (hoisted out of the per-call forward path).

    w1: [D_in, H]   (pre-transposed vs. torch linear1.weight)
    b1: [H] or [1, H]
    w2: [H, 1] or [H]  (pre-transposed vs. torch linear2.weight)
    b2: scalar / [1, 1]

    The hidden dim is zero-padded to a 128-lane multiple; padded units
    contribute relu(0)*0 = 0, so results are exact.  `input_dtype` controls
    the streamed x / resident w1 dtype (use jnp.bfloat16 on v6e/v7x for ~2x
    less input DMA and native-rate MXU; keep f32 for bit-level parity).
    """
    D_in, H = w1.shape
    H_pad = _round_up(max(H, 128), 128)
    w1_p = jnp.zeros((D_in, H_pad), input_dtype).at[:, :H].set(
        w1.astype(input_dtype))
    b1_p = jnp.zeros((1, H_pad), jnp.float32).at[:, :H].set(
        jnp.reshape(b1, (1, H)).astype(jnp.float32))
    w2_row = jnp.zeros((1, H_pad), jnp.float32).at[:, :H].set(
        jnp.reshape(w2, (1, H)).astype(jnp.float32))
    b2_s = jnp.reshape(jnp.asarray(b2, jnp.float32), (1, 1))
    return w1_p, b1_p, w2_row, b2_s


def neural_net1_forward(x, params, *, tb=4096):
    """NeuralNet1 forward: sigmoid(relu(x @ w1 + b1) @ w2 + b2) -> [B, 1]."""
    w1_p, b1_p, w2_row, b2_s = params
    B, D_in = x.shape
    H_pad = w1_p.shape[1]
    in_dtype = w1_p.dtype

    tb, B_pad = _choose_tile(B, tb)
    n_tiles = B_pad // tb

    x_p = x.astype(in_dtype)
    if B_pad != B:
        x_p = jnp.zeros((B_pad, D_in), in_dtype).at[:B].set(x_p)

    out = pl.pallas_call(
        _mlp_kernel,
        # Packed output: one lane-dense row of tb results per grid step.
        out_shape=jax.ShapeDtypeStruct((n_tiles, 1, tb), jnp.float32),
        grid_spec=pltpu.PrefetchScalarGridSpec(
            num_scalar_prefetch=0,
            grid=(n_tiles,),
            in_specs=[
                pl.BlockSpec((tb, D_in), lambda i: (i, 0)),     # x: streamed tiles
                pl.BlockSpec((D_in, H_pad), lambda i: (0, 0)),  # w1: VMEM-resident
                pl.BlockSpec((1, H_pad), lambda i: (0, 0)),     # b1: VMEM-resident
                pl.BlockSpec((1, H_pad), lambda i: (0, 0)),     # w2 row: resident
                pl.BlockSpec(memory_space=pltpu.MemorySpace.SMEM),  # b2 scalar
            ],
            out_specs=pl.BlockSpec((1, 1, tb), lambda i: (i, 0, 0)),
        ),
        compiler_params=pltpu.CompilerParams(
            # Batch axis is embarrassingly parallel -> sharded over both TCs
            # on v7x.  VMEM footprint is tiny even at tb=4096 (~3.5 MiB total
            # incl. double buffers), so no explicit vmem_limit_bytes needed;
            # re-budget against v7x's 64 MiB only if tb/D_in/H grow a lot.
            dimension_semantics=("parallel",),
        ),
    )(x_p, w1_p, b1_p, w2_row, b2_s)

    # (n_tiles, 1, tb) -> flat [B_pad] in row order, slice padding, -> [B, 1].
    return out.reshape(B_pad, 1)[:B]


if __name__ == "__main__":
    # Small shapes consistent with the module: input_size=32, hidden_size=32.
    # Batch chosen so the tile-selection path produces a 2-tile grid
    # (B=40 -> B_pad=48, tb=24) exercising batch padding + multi-core split.
    B, D_in, H = 40, 32, 32

    key = jax.random.PRNGKey(0)
    kx, kw1, kb1, kw2, kb2 = jax.random.split(key, 5)

    x = jax.random.normal(kx, (B, D_in), dtype=jnp.float32)
    # Deterministic synthetic parameters (nn.Linear shapes, pre-transposed).
    w1 = jax.random.normal(kw1, (D_in, H), dtype=jnp.float32) * 0.1
    b1 = jax.random.normal(kb1, (1, H), dtype=jnp.float32) * 0.1
    w2 = jax.random.normal(kw2, (H, 1), dtype=jnp.float32) * 0.1
    b2 = jax.random.normal(kb2, (1, 1), dtype=jnp.float32) * 0.1

    # One-time parameter prep (padding hoisted out of the forward path).
    params = prepare_neural_net1_params(w1, b1, w2, b2, input_dtype=jnp.float32)

    y = neural_net1_forward(x, params)
    jax.block_until_ready(y)

    # Pure-JAX reference of the same forward pass (full-precision matmuls).
    hi = jax.lax.Precision.HIGHEST
    ref = jax.nn.sigmoid(
        jnp.dot(jnp.maximum(jnp.dot(x, w1, precision=hi) + b1, 0.0), w2,
                precision=hi) + b2)
    assert y.shape == (B, 1)
    # Tolerance absorbs MXU default-precision matmul vs. f32 reference.
    assert jnp.allclose(y, ref, atol=2e-3, rtol=2e-3), "mismatch vs reference"

    print("KERNEL_OK")
</pallas_src>

<mosaic_0001>
module attributes {stable_mosaic.version = 11 : i64} {
  func.func @_mlp_kernel(%arg0: i32, %arg1: memref<24x32xf32, #tpu.memory_space<vmem>>, %arg2: memref<32x128xf32, #tpu.memory_space<vmem>>, %arg3: memref<1x128xf32, #tpu.memory_space<vmem>>, %arg4: memref<1x128xf32, #tpu.memory_space<vmem>>, %arg5: memref<1x1xf32, #tpu.memory_space<smem>>, %arg6: memref<1x1x24xf32, #tpu.memory_space<vmem>>) attributes {dimension_semantics = [#tpu.dimension_semantics<parallel>], iteration_bounds = array<i64: 2>, scalar_prefetch = 0 : i64, scratch_operands = 0 : i64, tpu.core_type = #tpu.core_type<tc>, window_params = [{transform_indices = @transform_0, window_bounds = array<i64: 24, 32>}, {pipeline_mode = #tpu.pipeline_mode<synchronous>, transform_indices = @transform_1, window_bounds = array<i64: 32, 128>}, {pipeline_mode = #tpu.pipeline_mode<synchronous>, transform_indices = @transform_2, window_bounds = array<i64: 1, 128>}, {pipeline_mode = #tpu.pipeline_mode<synchronous>, transform_indices = @transform_3, window_bounds = array<i64: 1, 128>}, {transform_indices = @transform_4, window_bounds = array<i64: 1, 1>}, {transform_indices = @transform_5, window_bounds = array<i64: 1, 1, 24>}]} {
    %c0 = arith.constant 0 : index
    %c0_0 = arith.constant 0 : index
    %0 = vector.load %arg1[%c0, %c0_0] : memref<24x32xf32, #tpu.memory_space<vmem>>, vector<24x32xf32>
    %c0_1 = arith.constant 0 : index
    %c0_2 = arith.constant 0 : index
    %1 = vector.load %arg2[%c0_1, %c0_2] : memref<32x128xf32, #tpu.memory_space<vmem>>, vector<32x128xf32>
    %cst = arith.constant dense<0.000000e+00> : vector<24x128xf32>
    %2 = tpu.matmul %0, %1, %cst {dimension_numbers = #tpu.dot_dimension_numbers<[1], [0], [0], [1], [0, 0, 1, 1], [], []>} : vector<24x32xf32>, vector<32x128xf32>, vector<24x128xf32> -> vector<24x128xf32>
    %c0_3 = arith.constant 0 : index
    %c0_4 = arith.constant 0 : index
    %3 = vector.load %arg3[%c0_3, %c0_4] : memref<1x128xf32, #tpu.memory_space<vmem>>, vector<1x128xf32>
    %4 = vector.broadcast %3 : vector<1x128xf32> to vector<24x128xf32>
    %5 = arith.addf %2, %4 : vector<24x128xf32>
    %cst_5 = arith.constant 0.000000e+00 : f32
    %6 = vector.broadcast %cst_5 : f32 to vector<24x128xf32>
    %7 = arith.maximumf %5, %6 : vector<24x128xf32>
    %c0_6 = arith.constant 0 : index
    %c0_7 = arith.constant 0 : index
    %8 = vector.load %arg4[%c0_6, %c0_7] : memref<1x128xf32, #tpu.memory_space<vmem>>, vector<1x128xf32>
    %9 = vector.broadcast %8 : vector<1x128xf32> to vector<24x128xf32>
    %10 = arith.mulf %7, %9 : vector<24x128xf32>
    %cst_8 = arith.constant dense<0.000000e+00> : vector<24xf32>
    %11 = vector.multi_reduction <add>, %10, %cst_8 [1] : vector<24x128xf32> to vector<24xf32>
    %12 = vector.shape_cast %11 : vector<24xf32> to vector<24x1xf32>
    %c0_9 = arith.constant 0 : index
    %c0_10 = arith.constant 0 : index
    %13 = memref.load %arg5[%c0_9, %c0_10] : memref<1x1xf32, #tpu.memory_space<smem>>
    %14 = vector.broadcast %13 : f32 to vector<24x1xf32>
    %15 = arith.addf %12, %14 : vector<24x1xf32>
    %16 = arith.negf %15 : vector<24x1xf32>
    %17 = math.exp %16 : vector<24x1xf32>
    %cst_11 = arith.constant 1.000000e+00 : f32
    %18 = vector.broadcast %cst_11 : f32 to vector<24x1xf32>
    %19 = arith.addf %18, %17 : vector<24x1xf32>
    %20 = arith.divf %18, %19 : vector<24x1xf32>
    %21 = vector.shape_cast %20 : vector<24x1xf32> to vector<1x1x24xf32>
    %c0_12 = arith.constant 0 : index
    %c0_13 = arith.constant 0 : index
    %c0_14 = arith.constant 0 : index
    %22 = vector.load %arg6[%c0_12, %c0_13, %c0_14] : memref<1x1x24xf32, #tpu.memory_space<vmem>>, vector<1x1x24xf32>
    tpu.vector_store %arg6[%c0_12, %c0_13, %c0_14], %21 {strides = array<i32>} : memref<1x1x24xf32, #tpu.memory_space<vmem>>, vector<1x1x24xf32>,
    return
  }
  func.func @transform_0(%arg0: i32) -> (i32, i32) {
    %c0_i32 = arith.constant 0 : i32
    %c0_i32_0 = arith.constant 0 : i32
    return %arg0, %c0_i32 : i32, i32
  }
  func.func @transform_1(%arg0: i32) -> (i32, i32) {
    %c0_i32 = arith.constant 0 : i32
    %c0_i32_0 = arith.constant 0 : i32
    %c0_i32_1 = arith.constant 0 : i32
    return %c0_i32, %c0_i32_0 : i32, i32
  }
  func.func @transform_2(%arg0: i32) -> (i32, i32) {
    %c0_i32 = arith.constant 0 : i32
    %c0_i32_0 = arith.constant 0 : i32
    %c0_i32_1 = arith.constant 0 : i32
    return %c0_i32, %c0_i32_0 : i32, i32
  }
  func.func @transform_3(%arg0: i32) -> (i32, i32) {
    %c0_i32 = arith.constant 0 : i32
    %c0_i32_0 = arith.constant 0 : i32
    %c0_i32_1 = arith.constant 0 : i32
    return %c0_i32, %c0_i32_0 : i32, i32
  }
  func.func @transform_4(%arg0: i32) -> (i32, i32) {
    %c0_i32 = arith.constant 0 : i32
    %c0_i32_0 = arith.constant 0 : i32
    %c0_i32_1 = arith.constant 0 : i32
    return %c0_i32, %c0_i32_0 : i32, i32
  }
  func.func @transform_5(%arg0: i32) -> (i32, i32, i32) {
    %c0_i32 = arith.constant 0 : i32
    %c0_i32_0 = arith.constant 0 : i32
    %c0_i32_1 = arith.constant 0 : i32
    return %arg0, %c0_i32, %c0_i32_0 : i32, i32, i32
  }
}

</mosaic_0001>

<llo_original>
// kernel: tpu_custom_call.1
$region0: #{tpu_custom_call.1}
  #allocation0 [shape = 'u32[]', space=smem, size = 0x4, offset = 0x4, fixed_abs, tag = 'smem constant byte address 0x4 - core index']
  #allocation1 [shape = 'u32[72,128]{1,0:T(1,128)}', space=vmem, size = 0x9000, scoped, tag = 'internal scratch']
  #allocation2 [shape = 'f32[1,1]{1,0:T(1,128)S(6)}', space=smem, size = 0x200, scoped, tag = 'scoped memory for tpu_custom_call.1']
  %s0 = inlined_call_operand.vmem [shape: f32[48,32], index: 0, kind: input, shape index: {}]
  %s1 = inlined_call_operand.vmem [shape: f32[32,128], index: 1, kind: input, shape index: {}]
  %s2 = inlined_call_operand.vmem [shape: f32[1,128], index: 2, kind: input, shape index: {}]
  %s3 = inlined_call_operand.vmem [shape: f32[1,128], index: 3, kind: input, shape index: {}]
  %s4 = inlined_call_operand.<no memory space> [shape: f32[1,1], index: 4, kind: input, shape index: {}]
  %s5 = inlined_call_operand.hbm [shape: f32[2,1,24], index: 5, kind: output, shape index: {}]
  %s6 = sld [smem:[#allocation0]]
  $region53: #{tpu_custom_call.1} parent=0
    _
  %s8 = ssub.s32 1, %s6
  %s9 = scalar_select 0, %s8, %s6
  %10 = sst [smem:[#allocation2]] %s4
  $region1: #{tpu_custom_call.1} parent=0
    #allocation3 [shape = 'u8[1024]{0}', space=vmem, size = 0x400, scoped, tag = 'output window, operand 0']
    #allocation4 [shape = 's32[2]{0}', space=sflag, size = 0x8, scoped, tag = 'scoped memory for tpu_custom_call.1']
    %11 = vsyncpa [#allocation4], 0
    %s12 = scalar_lea.sflag [#allocation4], 1
    %13 = vsyncpa %s12, 0
    loop: start=0, step=1, limit=4
    $region2: #{tpu_custom_call.1} parent=1 // loop_pre_header
      _
    $region3: #{tpu_custom_call.1} parent=1 // loop_header
      %s15 = sphi 0, %s19
      %p16 = scmp.ge.s32.totalorder %s15, 4
      %s25 = sphi 0, %s27
      %s28 = sphi 0, %s25
      %s29 = sphi 0, %s28
      %s45 = sphi 0, %s29
      %s49 = sphi 0, %s49
      %s51 = sphi 0, %s49
      %s52 = sphi 0, %s51
      %s66 = sphi 0, %s52
      %s70 = sphi 0, %s70
      %s72 = sphi 0, %s70
      %s73 = sphi 0, %s72
      %s87 = sphi 0, %s73
      %s91 = sphi 0, %s91
      %s93 = sphi 0, %s91
      %s94 = sphi 0, %s93
      %s108 = sphi 0, %s94
      %s112 = sphi 0, %s112
      %s114 = sphi 0, %s112
      %s115 = sphi 0, %s114
      %s129 = sphi 0, %s115
      %s135 = sphi 0, %s137
      %s138 = sphi 0, %s135
      %s139 = sphi 0, %s138
      %s155 = sphi 0, %s139
    $region4: #{tpu_custom_call.1} parent=1 // loop_header_branch
      %18 = sbr.rel (%p16) target = $region8
    $region5: #{tpu_custom_call.1} parent=1 // loop_body
      %s20 = ssub.s32 %s15, 1
      %s21 = ssub.s32 %s15, 2
      %s22 = sadd.s32 %s15, 1
      %s23 = ssub.s32 %s15, %s22
      %p24 = scmp.eq.s32.totalorder %s23, 0
      %s26 = sadd.s32 %s25, 1
      %s27 = scalar_select %p24, %s25, %s26
      %p30 = pneg %p24
      %p31 = scmp.eq.s32.totalorder %s15, 1
      %p32 = por %p30, %p31
      %p33 = scmp.ne.s32.totalorder %s25, %s28
      %p34 = scmp.eq.s32.totalorder %s15, 0
      %p35 = por %p33, %p34
      %p36 = scmp.ne.s32.totalorder %s25, %s28
      %p37 = scmp.eq.s32.totalorder %s20, 1
      %p38 = por %p36, %p37
      %p39 = scmp.ne.s32.totalorder %s28, %s29
      %p40 = scmp.eq.s32.totalorder %s20, 0
      %p41 = por %p39, %p40
      %p42 = scmp.ne.s32.totalorder %s28, %s29
      %p43 = scmp.eq.s32.totalorder %s21, 1
      %p44 = por %p42, %p43
      %p46 = scmp.ne.s32.totalorder %s29, %s45
      %p47 = scmp.eq.s32.totalorder %s21, 0
      %p48 = por %p46, %p47
      %s50 = sadd.s32 %s49, 1
      %p53 = scmp.eq.s32.totalorder %s15, 1
      %p54 = scmp.ne.s32.totalorder %s49, %s51
      %p55 = scmp.eq.s32.totalorder %s15, 0
      %p56 = por %p54, %p55
      %p57 = scmp.ne.s32.totalorder %s49, %s51
      %p58 = scmp.eq.s32.totalorder %s20, 1
      %p59 = por %p57, %p58
      %p60 = scmp.ne.s32.totalorder %s51, %s52
      %p61 = scmp.eq.s32.totalorder %s20, 0
      %p62 = por %p60, %p61
      %p63 = scmp.ne.s32.totalorder %s51, %s52
      %p64 = scmp.eq.s32.totalorder %s21, 1
      %p65 = por %p63, %p64
      %p67 = scmp.ne.s32.totalorder %s52, %s66
      %p68 = scmp.eq.s32.totalorder %s21, 0
      %p69 = por %p67, %p68
      %s71 = sadd.s32 %s70, 1
      %p74 = scmp.eq.s32.totalorder %s15, 1
      %p75 = scmp.ne.s32.totalorder %s70, %s72
      %p76 = scmp.eq.s32.totalorder %s15, 0
      %p77 = por %p75, %p76
      %p78 = scmp.ne.s32.totalorder %s70, %s72
      %p79 = scmp.eq.s32.totalorder %s20, 1
      %p80 = por %p78, %p79
      %p81 = scmp.ne.s32.totalorder %s72, %s73
      %p82 = scmp.eq.s32.totalorder %s20, 0
      %p83 = por %p81, %p82
      %p84 = scmp.ne.s32.totalorder %s72, %s73
      %p85 = scmp.eq.s32.totalorder %s21, 1
      %p86 = por %p84, %p85
      %p88 = scmp.ne.s32.totalorder %s73, %s87
      %p89 = scmp.eq.s32.totalorder %s21, 0
      %p90 = por %p88, %p89
      %s92 = sadd.s32 %s91, 1
      %p95 = scmp.eq.s32.totalorder %s15, 1
      %p96 = scmp.ne.s32.totalorder %s91, %s93
      %p97 = scmp.eq.s32.totalorder %s15, 0
      %p98 = por %p96, %p97
      %p99 = scmp.ne.s32.totalorder %s91, %s93
      %p100 = scmp.eq.s32.totalorder %s20, 1
      %p101 = por %p99, %p100
      %p102 = scmp.ne.s32.totalorder %s93, %s94
      %p103 = scmp.eq.s32.totalorder %s20, 0
      %p104 = por %p102, %p103
      %p105 = scmp.ne.s32.totalorder %s93, %s94
      %p106 = scmp.eq.s32.totalorder %s21, 1
      %p107 = por %p105, %p106
      %p109 = scmp.ne.s32.totalorder %s94, %s108
      %p110 = scmp.eq.s32.totalorder %s21, 0
      %p111 = por %p109, %p110
      %s113 = sadd.s32 %s112, 1
      %p116 = scmp.eq.s32.totalorder %s15, 1
      %p117 = scmp.ne.s32.totalorder %s112, %s114
      %p118 = scmp.eq.s32.totalorder %s15, 0
      %p119 = por %p117, %p118
      %p120 = scmp.ne.s32.totalorder %s112, %s114
      %p121 = scmp.eq.s32.totalorder %s20, 1
      %p122 = por %p120, %p121
      %p123 = scmp.ne.s32.totalorder %s114, %s115
      %p124 = scmp.eq.s32.totalorder %s20, 0
      %p125 = por %p123, %p124
      %p126 = scmp.ne.s32.totalorder %s114, %s115
      %p127 = scmp.eq.s32.totalorder %s21, 1
      %p128 = por %p126, %p127
      %p130 = scmp.ne.s32.totalorder %s115, %s129
      %p131 = scmp.eq.s32.totalorder %s21, 0
      %p132 = por %p130, %p131
      %s133 = ssub.s32 %s15, %s22
      %p134 = scmp.eq.s32.totalorder %s133, 0
      %s136 = sadd.s32 %s135, 1
      %s137 = scalar_select %p134, %s135, %s136
      %p140 = pneg %p134
      %p141 = scmp.eq.s32.totalorder %s15, 1
      %p142 = por %p140, %p141
      %p143 = scmp.ne.s32.totalorder %s135, %s138
      %p144 = scmp.eq.s32.totalorder %s15, 0
      %p145 = por %p143, %p144
      %p146 = scmp.ne.s32.totalorder %s135, %s138
      %p147 = scmp.eq.s32.totalorder %s20, 1
      %p148 = por %p146, %p147
      %p149 = scmp.ne.s32.totalorder %s138, %s139
      %p150 = scmp.eq.s32.totalorder %s20, 0
      %p151 = por %p149, %p150
      %p152 = scmp.ne.s32.totalorder %s138, %s139
      %p153 = scmp.eq.s32.totalorder %s21, 1
      %p154 = por %p152, %p153
      %p156 = scmp.ne.s32.totalorder %s139, %s155
      %p157 = scmp.eq.s32.totalorder %s21, 0
      %p158 = por %p156, %p157
      %p159 = scmp.le.s32.totalorder 1, %s15
      %p160 = scmp.lt.s32.totalorder %s15, 3
      %p161 = pnand %p159, %p160
      %p162 = pneg %p161
      // Predicated region
      $region9: #{tpu_custom_call.1} parent=5 // pred_check
        _
      $region10: #{tpu_custom_call.1} parent=5 // pred_check_branch
        %164 = sbr.rel (%p161) target = $region12
      $region11: #{tpu_custom_call.1} parent=5 // pred_region
        %s165 = ssub.s32 %s15, 1
        // Predicated region
        $region13: #{tpu_custom_call.1} parent=11 // pred_check
          %p166 = pneg %p62
        $region14: #{tpu_custom_call.1} parent=11 // pred_check_branch
          %168 = sbr.rel (%p166) target = $region16
        $region15: #{tpu_custom_call.1} parent=11 // pred_region
          _
        $region16: #{tpu_custom_call.1} parent=11 // pred_fallthru
          _
        // Predicated region
        $region17: #{tpu_custom_call.1} parent=11 // pred_check
          %p169 = pneg %p83
        $region18: #{tpu_custom_call.1} parent=11 // pred_check_branch
          %171 = sbr.rel (%p169) target = $region20
        $region19: #{tpu_custom_call.1} parent=11 // pred_region
          _
        $region20: #{tpu_custom_call.1} parent=11 // pred_fallthru
          _
        // Predicated region
        $region21: #{tpu_custom_call.1} parent=11 // pred_check
          %p172 = pneg %p104
        $region22: #{tpu_custom_call.1} parent=11 // pred_check_branch
          %174 = sbr.rel (%p172) target = $region24
        $region23: #{tpu_custom_call.1} parent=11 // pred_region
          _
        $region24: #{tpu_custom_call.1} parent=11 // pred_fallthru
          _
        // Predicated region
        $region25: #{tpu_custom_call.1} parent=11 // pred_check
          %p175 = pneg %p125
        $region26: #{tpu_custom_call.1} parent=11 // pred_check_branch
          %177 = sbr.rel (%p175) target = $region28
        $region27: #{tpu_custom_call.1} parent=11 // pred_region
          _
        $region28: #{tpu_custom_call.1} parent=11 // pred_fallthru
          _
      $region12: #{tpu_custom_call.1} parent=5 // pred_fallthru
        _
      %p178 = scmp.lt.s32.totalorder %s15, 2
      // Predicated region
      $region29: #{tpu_custom_call.1} parent=5 // pred_check
        %p179 = pneg %p178
      $region30: #{tpu_custom_call.1} parent=5 // pred_check_branch
        %181 = sbr.rel (%p179) target = $region32
      $region31: #{tpu_custom_call.1} parent=5 // pred_region
        // Predicated region
        $region33: #{tpu_custom_call.1} parent=31 // pred_check
          %p182 = pneg %p35
        $region34: #{tpu_custom_call.1} parent=31 // pred_check_branch
          %184 = sbr.rel (%p182) target = $region36
        $region35: #{tpu_custom_call.1} parent=31 // pred_region
          %s185 = smul.u32 3, %s15
          %p186 = scmp.lt.s32.totalorder %s185, 5
          %s187 = scalar_select %p186, %s185, 5
          %s188 = smul.addr %s187, 8
          %s189 = scalar_lea.vmem %s0, %s188
          %s190 = smul.u32 3, %s15
        $region36: #{tpu_custom_call.1} parent=31 // pred_fallthru
          _
      $region32: #{tpu_custom_call.1} parent=5 // pred_fallthru
        _
      %p191 = scmp.le.s32.totalorder 1, %s15
      %p192 = scmp.lt.s32.totalorder %s15, 3
      %p193 = pnand %p191, %p192
      %p194 = pneg %p193
      // Predicated region
      $region37: #{tpu_custom_call.1} parent=5 // pred_check
        _
      $region38: #{tpu_custom_call.1} parent=5 // pred_check_branch
        %196 = sbr.rel (%p193) target = $region40
      $region39: #{tpu_custom_call.1} parent=5 // pred_region
        %s197 = ssub.s32 %s15, 1
        %s198 = smul.u32 3, %s20
        %p199 = scmp.lt.s32.totalorder %s198, 5
        %s200 = scalar_select %p199, %s198, 5
        %s201 = smul.addr %s200, 8
        %s202 = scalar_lea.vmem %s0, %s201
        %p203 = pneg %p41
        %p204 = pneg %p38
        %p205 = pneg %p62
        %p206 = pneg %p59
        %p207 = pneg %p83
        %p208 = pneg %p80
        %p209 = pneg %p104
        %p210 = pneg %p101
        %p211 = pneg %p125
        %p212 = pneg %p122
        %p213 = pneg %p151
        %p214 = pneg %p148
        %s215 = sand.u32 %s138, 1
        %s216 = scalar_lea.sflag [#allocation4], %s215
        %s217 = sand.u32 %s138, 1
        %s218 = scalar_lea.vmem [#allocation3], %s217
        %s219 = smul.u32 3, %s20
        %p220 = scmp.lt.s32.totalorder %s219, 5
        %s221 = scalar_select %p220, %s219, 5
        %s222 = smul.addr %s221, 8
        %s223 = scalar_lea.vmem %s0, %s222
        %s224 = smul.u32 3, %s20
        %v225 = vld [vmem:[%s223] sm:$0xff]
        %v226 = vld [vmem:[%s223 + $0x8] sm:$0xff]
        %v227 = vld [vmem:[%s223 + $0x10] sm:$0xff]
        %v228 = vld [vmem:[%s1] sm:$0xff]
        %v229 = vld [vmem:[%s1 + $0x8] sm:$0xff]
        %v230 = vld [vmem:[%s1 + $0x10] sm:$0xff]
        %v231 = vld [vmem:[%s1 + $0x18] sm:$0xff]
        %v232 = vld [vmem:[%s2] sm:$0x1]
        %v234 = vperm.slane %v232, 0
        %vm236 = vcmask 261120
        %v238 = vsel %vm236, %v225, 0
        %v241 = vsel %vm236, %v226, 0
        %v244 = vsel %vm236, %v227, 0
        %246 = vmatpush.msra.mxu0 0.0
        %247 = vmatpush.msra.mxu0 0.0
        %248 = vmatpush.msra.mxu0 0.0
        %249 = vmatpush.msra.mxu0 0.0
        %250 = vmatpush.msra.mxu0 0.0
        %251 = vmatpush.msra.mxu0 0.0
        %252 = vmatpush.msra.mxu0 0.0
        %253 = vmatpush.msra.mxu0 0.0
        %254 = vmatpush.msra.mxu0 0.0
        %255 = vmatpush.msra.mxu0 0.0
        %256 = vmatpush.msra.mxu0 0.0
        %257 = vmatpush.msra.mxu0 0.0
        %258 = vmatpush.msra.mxu0 %v231
        %259 = vmatpush.msra.mxu0 %v230
        %260 = vmatpush.msra.mxu0 %v229
        %261 = vmatpush.msra.mxu0 %v228
        %262 = vmatmul.f32.gmra.mxu0 %v238
        %v263 = vpop.f32.mrf.mxu0
        %v264 = vadd.f32 %v234, %v263
        %265 = vmatmul.f32.gmra.mxu0 %v241
        %v266 = vpop.f32.mrf.mxu0
        %v267 = vadd.f32 %v234, %v266
        %268 = vmatmul.f32.gmra.mxu0 %v244
        %v269 = vpop.f32.mrf.mxu0
        %v270 = vadd.f32 %v234, %v269
        %271 = vdwg.mxu0
        %v272 = vmax.f32 %v264, 0.0
        %v273 = vmax.f32 %v267, 0.0
        %v274 = vmax.f32 %v270, 0.0
        %v275 = vld [vmem:[%s3] sm:$0x1]
        %v277 = vperm.slane %v275, 0
        %v279 = vmul.f32 %v272, %v277
        %v280 = vmul.f32 %v273, %v277
        %v281 = vmul.f32 %v274, %v277
        %282 = vadd.xlane.f32.xlu0 %v279
        %v283 = vpop.xlane.xlu0 %282
        %284 = vadd.xlane.f32.xlu0 %v280
        %v285 = vpop.xlane.xlu0 %284
        %286 = vadd.xlane.f32.xlu0 %v281
        %v287 = vpop.xlane.xlu0 %286
        %s288 = sld [smem:[#allocation2]]
        %v289 = vstv %s288
        %v290 = vadd.f32 %v283, %v289
        %v291 = vadd.f32 %v285, %v289
        %v292 = vadd.f32 %v287, %v289
        %v293 = vxor.u32 %v290, 2147483648
        %v294 = vxor.u32 %v291, 2147483648
        %v295 = vxor.u32 %v292, 2147483648
        %v296 = vmul.f32 %v293, 1.442695
        %v297 = vpow.pop %v296
        %v298 = vmul.f32 %v294, 1.442695
        %v299 = vpow.pop %v298
        %v300 = vmul.f32 %v295, 1.442695
        %v301 = vpow.pop %v300
        %v302 = vadd.f32 %v297, 1.0
        %v303 = vadd.f32 %v299, 1.0
        %v304 = vadd.f32 %v301, 1.0
        %v305 = vrcp.pop %v302
        %v306 = vmul.f32 %v302, %v305
        %v307 = vsub.f32 1.0, %v306
        %v308 = vmul.f32 %v305, %v307
        %v309 = vadd.f32 %v305, %v308
        %vm310 = vweird.f32 %v302
        %vm311 = vweird.f32 %v305
        %vm312 = vmor %vm310, %vm311
        %v313 = vsel %vm312, %v305, %v309
        %v314 = vand.u32 2147483647, %v302
        %vm315 = vcmp.eq.f32.partialorder %v314, 8.507059e+37
        %v316 = vand.u32 %v302, 2147483648
        %v317 = vor.u32 1.1754944e-38, %v316
        %v318 = vsel %vm315, %v317, %v313
        %v319 = vmul.f32 1.0, %v318
        %v320 = vrcp.pop %v303
        %v321 = vmul.f32 %v303, %v320
        %v322 = vsub.f32 1.0, %v321
        %v323 = vmul.f32 %v320, %v322
        %v324 = vadd.f32 %v320, %v323
        %vm325 = vweird.f32 %v303
        %vm326 = vweird.f32 %v320
        %vm327 = vmor %vm325, %vm326
        %v328 = vsel %vm327, %v320, %v324
        %v329 = vand.u32 2147483647, %v303
        %vm330 = vcmp.eq.f32.partialorder %v329, 8.507059e+37
        %v331 = vand.u32 %v303, 2147483648
        %v332 = vor.u32 1.1754944e-38, %v331
        %v333 = vsel %vm330, %v332, %v328
        %v334 = vmul.f32 1.0, %v333
        %v335 = vrcp.pop %v304
        %v336 = vmul.f32 %v304, %v335
        %v337 = vsub.f32 1.0, %v336
        %v338 = vmul.f32 %v335, %v337
        %v339 = vadd.f32 %v335, %v338
        %vm340 = vweird.f32 %v304
        %vm341 = vweird.f32 %v335
        %vm342 = vmor %vm340, %vm341
        %v343 = vsel %vm342, %v335, %v339
        %v344 = vand.u32 2147483647, %v304
        %vm345 = vcmp.eq.f32.partialorder %v344, 8.507059e+37
        %v346 = vand.u32 %v304, 2147483648
        %v347 = vor.u32 1.1754944e-38, %v346
        %v348 = vsel %vm345, %v347, %v343
        %v349 = vmul.f32 1.0, %v348
        %v353 = vlaneseq
        %v354 = vand.u32 %v353, 127
        %v355 = vperm.slane %v319, %v354
        %v356 = vadd.s32 %v354, 4294967288
        %v357 = vperm.slane %v334, %v356
        %vm358 = vcmask 130112
        %v359 = vsel %vm358, %v357, %v355
        %v360 = vadd.s32 %v354, 4294967280
        %v361 = vperm.slane %v349, %v360
        %vm362 = vcmask 195712
        %v363 = vsel %vm362, %v361, %v359
        %vm365 = vcmask 188416
        %366 = vst.msk [vmem:[%s218] sm:$0x1] %vm365, %v363
        %s367 = sand.u32 %s138, 1
        %s368 = scalar_lea.sflag [#allocation4], %s367
        %s369 = sand.u32 %s138, 1
        %s370 = scalar_lea.vmem [#allocation3], %s369
        // Predicated region
        $region41: #{tpu_custom_call.1} parent=39 // pred_check
          %p371 = pneg %p148
        $region42: #{tpu_custom_call.1} parent=39 // pred_check_branch
          %373 = sbr.rel (%p371) target = $region44
        $region43: #{tpu_custom_call.1} parent=39 // pred_region
          %375 = vsyncadd %s368, 0
          %s376 = scalar_lea.hbm %s5, %s20
          %s378 = sshll.u32 %s370, 4
          %s379 = int_to_ptr.vmem [resolvable:$true] %s378
          %s380 = sshll.u32 %s376, 4
          %s381 = int_to_ptr.hbm [resolvable:$true] %s380
          %383 = dma.vmem_to_hbm [thread:$0]  %s379, 16, %s381, %s368
        $region44: #{tpu_custom_call.1} parent=39 // pred_fallthru
          _
      $region40: #{tpu_custom_call.1} parent=5 // pred_fallthru
        _
      %p384 = scmp.le.s32.totalorder 2, %s15
      // Predicated region
      $region45: #{tpu_custom_call.1} parent=5 // pred_check
        %p385 = pneg %p384
      $region46: #{tpu_custom_call.1} parent=5 // pred_check_branch
        %387 = sbr.rel (%p385) target = $region48
      $region47: #{tpu_custom_call.1} parent=5 // pred_region
        %s388 = ssub.s32 %s15, 2
        // Predicated region
        $region49: #{tpu_custom_call.1} parent=47 // pred_check
          %p389 = pneg %p154
        $region50: #{tpu_custom_call.1} parent=47 // pred_check_branch
          %391 = sbr.rel (%p389) target = $region52
        $region51: #{tpu_custom_call.1} parent=47 // pred_region
          %s392 = sand.u32 %s139, 1
          %s393 = scalar_lea.sflag [#allocation4], %s392
          %s394 = sand.u32 %s139, 1
          %s395 = scalar_lea.vmem [#allocation3], %s394
          %397 = dma.done %s393, 16
        $region52: #{tpu_custom_call.1} parent=47 // pred_fallthru
          _
      $region48: #{tpu_custom_call.1} parent=5 // pred_fallthru
        _
    $region6: #{tpu_custom_call.1} parent=1 // loop_footer
      %s19 = sadd.s32 1, %s15
    $region7: #{tpu_custom_call.1} parent=1 // loop_footer_branch
      %14 = sbr.rel target = $region3
    $region8: #{tpu_custom_call.1} parent=1 // loop_exit
      _
    %398 = vsyncpa [#allocation4], 1
    %s399 = scalar_lea.sflag [#allocation4], 1
    %400 = vsyncpa %s399, 1

</llo_original>
